<compile_context>
chip_gen: v7x
topology: tpu7x:2x2x1
jax: 0.10.0
libtpu: 0.0.40
codegen_flags: <defaults>
</compile_context>

<pallas_src>
import jax
import jax.numpy as jnp
from jax.experimental import pallas as pl
from jax.experimental.pallas import tpu as pltpu

_LANE = 128
_SUBLANE = 8


def _round_up(n, m):
    return ((n + m - 1) // m) * m


def _pad2d(a, rows, cols):
    pr, pc = rows - a.shape[0], cols - a.shape[1]
    if pr == 0 and pc == 0:
        return a
    return jnp.pad(a, ((0, pr), (0, pc)))


def _swiglu_ffn_kernel(x_ref, w1_ref, b1_ref, w3_ref, b3_ref, w2_ref, b2_ref,
                       o_ref, acc_ref):
    j = pl.program_id(1)

    @pl.when(j == 0)
    def _init():
        # Fold the output bias into the accumulator init (added exactly once).
        acc_ref[...] = (jnp.zeros(acc_ref.shape, jnp.float32)
                        + b2_ref[...].astype(jnp.float32))

    x = x_ref[...]                                                     # (tm, E)
    h1 = jnp.dot(x, w1_ref[...], preferred_element_type=jnp.float32)   # (tm, tn)
    h1 = h1 + b1_ref[...]
    h3 = jnp.dot(x, w3_ref[...], preferred_element_type=jnp.float32)   # (tm, tn)
    h3 = h3 + b3_ref[...]
    gated = (h1 * jax.nn.sigmoid(h1)) * h3                             # SiLU(h1)*h3, f32
    acc_ref[...] += jnp.dot(gated.astype(w2_ref.dtype), w2_ref[...],
                            preferred_element_type=jnp.float32)        # (tm, E)

    @pl.when(j == pl.num_programs(1) - 1)
    def _writeback():
        o_ref[...] = acc_ref[...].astype(o_ref.dtype)


def gated_feed_forward(x, w1, b1, w3, b3, w2, b2, *, tm=256, tn=512):
    """x: (..., E).  w1/w3: (E, H), w2: (H, E).  Biases may be None (bias=False)."""
    orig_shape = x.shape
    E = orig_shape[-1]
    H = w1.shape[1]
    x2d = x.reshape(-1, E)
    M = x2d.shape[0]

    pdt = w1.dtype
    if b1 is None:
        b1 = jnp.zeros((H,), pdt)
    if b3 is None:
        b3 = jnp.zeros((H,), pdt)
    if b2 is None:
        b2 = jnp.zeros((E,), pdt)

    # --- tile sizes: lane-dense (x128) last dims, sublane-aligned (x8) row tiles ---
    E_pad = _round_up(E, _LANE)
    tm = max(_SUBLANE, min(tm, _round_up(M, _SUBLANE)))
    tm = _round_up(tm, _SUBLANE)
    M_pad = _round_up(M, tm)
    tn = max(_LANE, min(tn, _round_up(H, _LANE)))
    tn = _round_up(tn, _LANE)
    H_pad = _round_up(H, tn)

    # --- zero-pad operands (exact: padded lanes/rows contribute nothing) ---
    x_p = _pad2d(x2d, M_pad, E_pad)
    w1_p = _pad2d(w1, E_pad, H_pad)
    w3_p = _pad2d(w3, E_pad, H_pad)
    w2_p = _pad2d(w2, H_pad, E_pad)
    b1_p = _pad2d(b1.reshape(1, H), 1, H_pad)
    b3_p = _pad2d(b3.reshape(1, H), 1, H_pad)
    b2_p = _pad2d(b2.reshape(1, E), 1, E_pad)

    grid = (M_pad // tm, H_pad // tn)

    # VMEM budget: double-buffered streaming blocks + f32 accumulator + headroom,
    # clamped so it is legal on every generation (v7x physical VMEM = 64 MiB/TC).
    isz = jnp.dtype(x.dtype).itemsize
    blk_bytes = isz * (tm * E_pad            # x tile
                       + 2 * E_pad * tn      # w1, w3 slabs
                       + tn * E_pad          # w2 slab
                       + 2 * tn + E_pad      # biases
                       + tm * E_pad)         # out tile
    vmem_limit = int(min(max(2 * blk_bytes + 4 * tm * E_pad + (4 << 20), 32 << 20),
                         48 << 20))

    out = pl.pallas_call(
        _swiglu_ffn_kernel,
        out_shape=jax.ShapeDtypeStruct((M_pad, E_pad), x.dtype),
        grid_spec=pltpu.PrefetchScalarGridSpec(
            num_scalar_prefetch=0,
            grid=grid,
            in_specs=[
                pl.BlockSpec((tm, E_pad), lambda i, j: (i, 0)),   # x tile
                pl.BlockSpec((E_pad, tn), lambda i, j: (0, j)),   # w1 slab
                pl.BlockSpec((1, tn),     lambda i, j: (0, j)),   # b1 slab
                pl.BlockSpec((E_pad, tn), lambda i, j: (0, j)),   # w3 slab
                pl.BlockSpec((1, tn),     lambda i, j: (0, j)),   # b3 slab
                pl.BlockSpec((tn, E_pad), lambda i, j: (j, 0)),   # w2 slab
                pl.BlockSpec((1, E_pad),  lambda i, j: (0, 0)),   # b2
            ],
            out_specs=pl.BlockSpec((tm, E_pad), lambda i, j: (i, 0)),
            scratch_shapes=[pltpu.VMEM((tm, E_pad), jnp.float32)],
        ),
        compiler_params=pltpu.CompilerParams(
            dimension_semantics=("parallel", "arbitrary"),
            vmem_limit_bytes=vmem_limit,
        ),
    )(x_p, w1_p, b1_p, w3_p, b3_p, w2_p, b2_p)

    return out[:M, :E].reshape(orig_shape)


def _reference(x, w1, b1, w3, b3, w2, b2):
    h1 = x @ w1 + b1
    h3 = x @ w3 + b3
    g = (h1 * jax.nn.sigmoid(h1)) * h3
    return g @ w2 + b2


if __name__ == "__main__":
    # config: embed_dim=32, hidden_dim=64, bias=True; x: (batch=2, seq=8, embed_dim)
    batch, seq, embed_dim, hidden_dim = 2, 8, 32, 64

    key = jax.random.PRNGKey(0)
    kx, k1, kb1, k3, kb3, k2, kb2 = jax.random.split(key, 7)

    x = jax.random.normal(kx, (batch, seq, embed_dim), dtype=jnp.float32)
    # deterministic parameter init (synthetic; shapes match nn.Linear, pre-transposed)
    w1 = jax.random.normal(k1, (embed_dim, hidden_dim), dtype=jnp.float32) * 0.05
    b1 = jax.random.normal(kb1, (hidden_dim,), dtype=jnp.float32) * 0.01
    w3 = jax.random.normal(k3, (embed_dim, hidden_dim), dtype=jnp.float32) * 0.05
    b3 = jax.random.normal(kb3, (hidden_dim,), dtype=jnp.float32) * 0.01
    w2 = jax.random.normal(k2, (hidden_dim, embed_dim), dtype=jnp.float32) * 0.05
    b2 = jax.random.normal(kb2, (embed_dim,), dtype=jnp.float32) * 0.01

    out = gated_feed_forward(x, w1, b1, w3, b3, w2, b2)
    out = jax.block_until_ready(out)

    ref = _reference(x, w1, b1, w3, b3, w2, b2)
    assert out.shape == x.shape
    assert jnp.allclose(out, ref, atol=1e-5, rtol=1e-5), "mismatch vs reference"

    print("KERNEL_OK")
</pallas_src>

<mosaic_0001>
module attributes {stable_mosaic.version = 11 : i64} {
  func.func @_swiglu_ffn_kernel(%arg0: i32, %arg1: i32, %arg2: memref<16x128xf32, #tpu.memory_space<vmem>>, %arg3: memref<128x128xf32, #tpu.memory_space<vmem>>, %arg4: memref<1x128xf32, #tpu.memory_space<vmem>>, %arg5: memref<128x128xf32, #tpu.memory_space<vmem>>, %arg6: memref<1x128xf32, #tpu.memory_space<vmem>>, %arg7: memref<128x128xf32, #tpu.memory_space<vmem>>, %arg8: memref<1x128xf32, #tpu.memory_space<vmem>>, %arg9: memref<16x128xf32, #tpu.memory_space<vmem>>, %arg10: memref<16x128xf32, #tpu.memory_space<vmem>>) attributes {dimension_semantics = [#tpu.dimension_semantics<parallel>, #tpu.dimension_semantics<arbitrary>], iteration_bounds = array<i64: 1, 1>, scalar_prefetch = 0 : i64, scratch_operands = 1 : i64, tpu.core_type = #tpu.core_type<tc>, window_params = [{transform_indices = @transform_0, window_bounds = array<i64: 16, 128>}, {transform_indices = @transform_1, window_bounds = array<i64: 128, 128>}, {transform_indices = @transform_2, window_bounds = array<i64: 1, 128>}, {transform_indices = @transform_3, window_bounds = array<i64: 128, 128>}, {transform_indices = @transform_4, window_bounds = array<i64: 1, 128>}, {transform_indices = @transform_5, window_bounds = array<i64: 128, 128>}, {pipeline_mode = #tpu.pipeline_mode<synchronous>, transform_indices = @transform_6, window_bounds = array<i64: 1, 128>}, {transform_indices = @transform_7, window_bounds = array<i64: 16, 128>}]} {
    %c0_i32 = arith.constant 0 : i32
    %0 = arith.cmpi eq, %arg1, %c0_i32 : i32
    %1 = arith.extui %0 : i1 to i32
    %c0_i32_0 = arith.constant 0 : i32
    %2 = arith.cmpi ne, %1, %c0_i32_0 : i32
    scf.if %2 {
      %cst_21 = arith.constant 0.000000e+00 : f32
      %29 = vector.broadcast %cst_21 : f32 to vector<16x128xf32>
      %c0_22 = arith.constant 0 : index
      %c0_23 = arith.constant 0 : index
      %30 = vector.load %arg8[%c0_22, %c0_23] : memref<1x128xf32, #tpu.memory_space<vmem>>, vector<1x128xf32>
      %31 = vector.broadcast %30 : vector<1x128xf32> to vector<16x128xf32>
      %32 = arith.addf %29, %31 : vector<16x128xf32>
      %c0_24 = arith.constant 0 : index
      %c0_25 = arith.constant 0 : index
      %33 = vector.load %arg10[%c0_24, %c0_25] : memref<16x128xf32, #tpu.memory_space<vmem>>, vector<16x128xf32>
      tpu.vector_store %arg10[%c0_24, %c0_25], %32 {strides = array<i32>} : memref<16x128xf32, #tpu.memory_space<vmem>>, vector<16x128xf32>,
    } else {
    }
    %c0 = arith.constant 0 : index
    %c0_1 = arith.constant 0 : index
    %3 = vector.load %arg2[%c0, %c0_1] : memref<16x128xf32, #tpu.memory_space<vmem>>, vector<16x128xf32>
    %c0_2 = arith.constant 0 : index
    %c0_3 = arith.constant 0 : index
    %4 = vector.load %arg3[%c0_2, %c0_3] : memref<128x128xf32, #tpu.memory_space<vmem>>, vector<128x128xf32>
    %cst = arith.constant dense<0.000000e+00> : vector<16x128xf32>
    %5 = tpu.matmul %3, %4, %cst {dimension_numbers = #tpu.dot_dimension_numbers<[1], [0], [0], [1], [0, 0, 1, 1], [], []>} : vector<16x128xf32>, vector<128x128xf32>, vector<16x128xf32> -> vector<16x128xf32>
    %c0_4 = arith.constant 0 : index
    %c0_5 = arith.constant 0 : index
    %6 = vector.load %arg4[%c0_4, %c0_5] : memref<1x128xf32, #tpu.memory_space<vmem>>, vector<1x128xf32>
    %7 = vector.broadcast %6 : vector<1x128xf32> to vector<16x128xf32>
    %8 = arith.addf %5, %7 : vector<16x128xf32>
    %c0_6 = arith.constant 0 : index
    %c0_7 = arith.constant 0 : index
    %9 = vector.load %arg5[%c0_6, %c0_7] : memref<128x128xf32, #tpu.memory_space<vmem>>, vector<128x128xf32>
    %cst_8 = arith.constant dense<0.000000e+00> : vector<16x128xf32>
    %10 = tpu.matmul %3, %9, %cst_8 {dimension_numbers = #tpu.dot_dimension_numbers<[1], [0], [0], [1], [0, 0, 1, 1], [], []>} : vector<16x128xf32>, vector<128x128xf32>, vector<16x128xf32> -> vector<16x128xf32>
    %c0_9 = arith.constant 0 : index
    %c0_10 = arith.constant 0 : index
    %11 = vector.load %arg6[%c0_9, %c0_10] : memref<1x128xf32, #tpu.memory_space<vmem>>, vector<1x128xf32>
    %12 = vector.broadcast %11 : vector<1x128xf32> to vector<16x128xf32>
    %13 = arith.addf %10, %12 : vector<16x128xf32>
    %14 = arith.negf %8 : vector<16x128xf32>
    %15 = math.exp %14 : vector<16x128xf32>
    %cst_11 = arith.constant 1.000000e+00 : f32
    %16 = vector.broadcast %cst_11 : f32 to vector<16x128xf32>
    %17 = arith.addf %16, %15 : vector<16x128xf32>
    %18 = arith.divf %16, %17 : vector<16x128xf32>
    %19 = arith.mulf %8, %18 : vector<16x128xf32>
    %20 = arith.mulf %19, %13 : vector<16x128xf32>
    %c0_12 = arith.constant 0 : index
    %c0_13 = arith.constant 0 : index
    %21 = vector.load %arg10[%c0_12, %c0_13] : memref<16x128xf32, #tpu.memory_space<vmem>>, vector<16x128xf32>
    %c0_14 = arith.constant 0 : index
    %c0_15 = arith.constant 0 : index
    %22 = vector.load %arg7[%c0_14, %c0_15] : memref<128x128xf32, #tpu.memory_space<vmem>>, vector<128x128xf32>
    %cst_16 = arith.constant dense<0.000000e+00> : vector<16x128xf32>
    %23 = tpu.matmul %20, %22, %cst_16 {dimension_numbers = #tpu.dot_dimension_numbers<[1], [0], [0], [1], [0, 0, 1, 1], [], []>} : vector<16x128xf32>, vector<128x128xf32>, vector<16x128xf32> -> vector<16x128xf32>
    %24 = arith.addf %21, %23 : vector<16x128xf32>
    %c0_17 = arith.constant 0 : index
    %c0_18 = arith.constant 0 : index
    %25 = vector.load %arg10[%c0_17, %c0_18] : memref<16x128xf32, #tpu.memory_space<vmem>>, vector<16x128xf32>
    tpu.vector_store %arg10[%c0_17, %c0_18], %24 {strides = array<i32>} : memref<16x128xf32, #tpu.memory_space<vmem>>, vector<16x128xf32>,
    %c0_i32_19 = arith.constant 0 : i32
    %26 = arith.cmpi eq, %arg1, %c0_i32_19 : i32
    %27 = arith.extui %26 : i1 to i32
    %c0_i32_20 = arith.constant 0 : i32
    %28 = arith.cmpi ne, %27, %c0_i32_20 : i32
    scf.if %28 {
      %c0_21 = arith.constant 0 : index
      %c0_22 = arith.constant 0 : index
      %29 = vector.load %arg10[%c0_21, %c0_22] : memref<16x128xf32, #tpu.memory_space<vmem>>, vector<16x128xf32>
      %c0_23 = arith.constant 0 : index
      %c0_24 = arith.constant 0 : index
      %30 = vector.load %arg9[%c0_23, %c0_24] : memref<16x128xf32, #tpu.memory_space<vmem>>, vector<16x128xf32>
      tpu.vector_store %arg9[%c0_23, %c0_24], %29 {strides = array<i32>} : memref<16x128xf32, #tpu.memory_space<vmem>>, vector<16x128xf32>,
    } else {
    }
    return
  }
  func.func @transform_0(%arg0: i32, %arg1: i32) -> (i32, i32) {
    %c0_i32 = arith.constant 0 : i32
    %c0_i32_0 = arith.constant 0 : i32
    return %arg0, %c0_i32 : i32, i32
  }
  func.func @transform_1(%arg0: i32, %arg1: i32) -> (i32, i32) {
    %c0_i32 = arith.constant 0 : i32
    %c0_i32_0 = arith.constant 0 : i32
    return %c0_i32, %arg1 : i32, i32
  }
  func.func @transform_2(%arg0: i32, %arg1: i32) -> (i32, i32) {
    %c0_i32 = arith.constant 0 : i32
    %c0_i32_0 = arith.constant 0 : i32
    return %c0_i32, %arg1 : i32, i32
  }
  func.func @transform_3(%arg0: i32, %arg1: i32) -> (i32, i32) {
    %c0_i32 = arith.constant 0 : i32
    %c0_i32_0 = arith.constant 0 : i32
    return %c0_i32, %arg1 : i32, i32
  }
  func.func @transform_4(%arg0: i32, %arg1: i32) -> (i32, i32) {
    %c0_i32 = arith.constant 0 : i32
    %c0_i32_0 = arith.constant 0 : i32
    return %c0_i32, %arg1 : i32, i32
  }
  func.func @transform_5(%arg0: i32, %arg1: i32) -> (i32, i32) {
    %c0_i32 = arith.constant 0 : i32
    %c0_i32_0 = arith.constant 0 : i32
    return %arg1, %c0_i32 : i32, i32
  }
  func.func @transform_6(%arg0: i32, %arg1: i32) -> (i32, i32) {
    %c0_i32 = arith.constant 0 : i32
    %c0_i32_0 = arith.constant 0 : i32
    %c0_i32_1 = arith.constant 0 : i32
    return %c0_i32, %c0_i32_0 : i32, i32
  }
  func.func @transform_7(%arg0: i32, %arg1: i32) -> (i32, i32) {
    %c0_i32 = arith.constant 0 : i32
    %c0_i32_0 = arith.constant 0 : i32
    return %arg0, %c0_i32 : i32, i32
  }
}

</mosaic_0001>

<llo_original>
// kernel: tpu_custom_call.1
$region0: #{tpu_custom_call.1}
  #allocation0 [shape = 'u32[]', space=smem, size = 0x4, offset = 0x4, fixed_abs, tag = 'smem constant byte address 0x4 - core index']
  #allocation1 [shape = 'u32[144,128]{1,0:T(1,128)}', space=vmem, size = 0x12000, scoped, tag = 'internal scratch']
  #allocation2 [shape = 'f32[16,128]{1,0:T(8,128)}', space=vmem, size = 0x2000, scoped, tag = 'scratch operand']
  %s0 = inlined_call_operand.hbm [shape: f32[16,128], index: 0, kind: input, shape index: {}]
  %s1 = inlined_call_operand.hbm [shape: f32[128,128], index: 1, kind: input, shape index: {}]
  %s2 = inlined_call_operand.vmem [shape: f32[1,128], index: 2, kind: input, shape index: {}]
  %s3 = inlined_call_operand.hbm [shape: f32[128,128], index: 3, kind: input, shape index: {}]
  %s4 = inlined_call_operand.vmem [shape: f32[1,128], index: 4, kind: input, shape index: {}]
  %s5 = inlined_call_operand.hbm [shape: f32[128,128], index: 5, kind: input, shape index: {}]
  %s6 = inlined_call_operand.vmem [shape: f32[1,128], index: 6, kind: input, shape index: {}]
  %s7 = inlined_call_operand.hbm [shape: f32[16,128], index: 7, kind: output, shape index: {}]
  %s8 = sld [smem:[#allocation0]]
  $region62: #{tpu_custom_call.1} parent=0
    _
  %s10 = ssub.s32 1, %s8
  %s11 = scalar_select 0, %s10, %s8
  $region1: #{tpu_custom_call.1} parent=0
    #allocation3 [shape = 'u8[8192]{0}', space=vmem, size = 0x2000, scoped, tag = 'input window, operand 0, single buffered']
    #allocation4 [shape = 's32[1]{0}', space=sflag, size = 0x4, scoped, tag = 'scoped memory for tpu_custom_call.1']
    #allocation5 [shape = 's32[1]{0}', space=sflag, size = 0x4, scoped, tag = 'scoped memory for tpu_custom_call.1']
    #allocation6 [shape = 'u8[65536]{0}', space=vmem, size = 0x10000, scoped, tag = 'input window, operand 1, single buffered']
    #allocation7 [shape = 's32[1]{0}', space=sflag, size = 0x4, scoped, tag = 'scoped memory for tpu_custom_call.1']
    #allocation8 [shape = 'u8[65536]{0}', space=vmem, size = 0x10000, scoped, tag = 'input window, operand 3, single buffered']
    #allocation9 [shape = 'u8[65536]{0}', space=vmem, size = 0x10000, scoped, tag = 'input window, operand 5, single buffered']
    #allocation10 [shape = 's32[1]{0}', space=sflag, size = 0x4, scoped, tag = 'scoped memory for tpu_custom_call.1']
    #allocation11 [shape = 'u8[8192]{0}', space=vmem, size = 0x2000, scoped, tag = 'output window, operand 0, single buffered']
    %12 = vsyncpa [#allocation4], 0
    %13 = vsyncpa [#allocation7], 0
    %14 = vsyncpa [#allocation10], 0
    %15 = vsyncpa [#allocation5], 0
    // Predicated region
    $region2: #{tpu_custom_call.1} parent=1 // pred_check
      _
    $region3: #{tpu_custom_call.1} parent=1 // pred_check_branch
      %17 = sbr.rel (0) target = $region5
    $region4: #{tpu_custom_call.1} parent=1 // pred_region
      %s19 = ssub.s32 256, 256
      %20 = vsyncadd [#allocation4], %s19
      %s21 = sshll.u32 [#allocation3], 4
      %s22 = int_to_ptr.vmem [resolvable:$true] %s21
      %27 = dma.hbm_to_vmem [thread:$0]  %s0, 256, %s22, [#allocation4], 128, 128, 8
    $region5: #{tpu_custom_call.1} parent=1 // pred_fallthru
      _
    // Predicated region
    $region6: #{tpu_custom_call.1} parent=1 // pred_check
      _
    $region7: #{tpu_custom_call.1} parent=1 // pred_check_branch
      %29 = sbr.rel (0) target = $region9
    $region8: #{tpu_custom_call.1} parent=1 // pred_region
      %s31 = ssub.s32 2048, 2048
      %32 = vsyncadd [#allocation7], %s31
      %s33 = sshll.u32 [#allocation6], 4
      %s34 = int_to_ptr.vmem [resolvable:$true] %s33
      %39 = dma.hbm_to_vmem [thread:$0]  %s1, 2048, %s34, [#allocation7], 128, 128, 8
    $region9: #{tpu_custom_call.1} parent=1 // pred_fallthru
      _
    // Predicated region
    $region10: #{tpu_custom_call.1} parent=1 // pred_check
      _
    $region11: #{tpu_custom_call.1} parent=1 // pred_check_branch
      %41 = sbr.rel (0) target = $region13
    $region12: #{tpu_custom_call.1} parent=1 // pred_region
      _
    $region13: #{tpu_custom_call.1} parent=1 // pred_fallthru
      _
    // Predicated region
    $region14: #{tpu_custom_call.1} parent=1 // pred_check
      _
    $region15: #{tpu_custom_call.1} parent=1 // pred_check_branch
      %43 = sbr.rel (0) target = $region17
    $region16: #{tpu_custom_call.1} parent=1 // pred_region
      %s45 = ssub.s32 2048, 2048
      %46 = vsyncadd [#allocation7], %s45
      %s47 = sshll.u32 [#allocation8], 4
      %s48 = int_to_ptr.vmem [resolvable:$true] %s47
      %53 = dma.hbm_to_vmem [thread:$0]  %s3, 2048, %s48, [#allocation7], 128, 128, 8
    $region17: #{tpu_custom_call.1} parent=1 // pred_fallthru
      _
    // Predicated region
    $region18: #{tpu_custom_call.1} parent=1 // pred_check
      _
    $region19: #{tpu_custom_call.1} parent=1 // pred_check_branch
      %55 = sbr.rel (0) target = $region21
    $region20: #{tpu_custom_call.1} parent=1 // pred_region
      _
    $region21: #{tpu_custom_call.1} parent=1 // pred_fallthru
      _
    // Predicated region
    $region22: #{tpu_custom_call.1} parent=1 // pred_check
      _
    $region23: #{tpu_custom_call.1} parent=1 // pred_check_branch
      %57 = sbr.rel (0) target = $region25
    $region24: #{tpu_custom_call.1} parent=1 // pred_region
      %s59 = ssub.s32 2048, 2048
      %60 = vsyncadd [#allocation10], %s59
      %s61 = sshll.u32 [#allocation9], 4
      %s62 = int_to_ptr.vmem [resolvable:$true] %s61
      %67 = dma.hbm_to_vmem [thread:$0]  %s5, 2048, %s62, [#allocation10], 128, 128, 8
    $region25: #{tpu_custom_call.1} parent=1 // pred_fallthru
      _
    // Predicated region
    $region26: #{tpu_custom_call.1} parent=1 // pred_check
      _
    $region27: #{tpu_custom_call.1} parent=1 // pred_check_branch
      %69 = sbr.rel (0) target = $region29
    $region28: #{tpu_custom_call.1} parent=1 // pred_region
      _
    $region29: #{tpu_custom_call.1} parent=1 // pred_fallthru
      _
    // Predicated region
    $region30: #{tpu_custom_call.1} parent=1 // pred_check
      _
    $region31: #{tpu_custom_call.1} parent=1 // pred_check_branch
      %71 = sbr.rel (0) target = $region33
    $region32: #{tpu_custom_call.1} parent=1 // pred_region
      %72 = dma.done [#allocation4], 256
    $region33: #{tpu_custom_call.1} parent=1 // pred_fallthru
      _
    // Predicated region
    $region34: #{tpu_custom_call.1} parent=1 // pred_check
      _
    $region35: #{tpu_custom_call.1} parent=1 // pred_check_branch
      %74 = sbr.rel (0) target = $region37
    $region36: #{tpu_custom_call.1} parent=1 // pred_region
      %75 = dma.done [#allocation7], 2048
    $region37: #{tpu_custom_call.1} parent=1 // pred_fallthru
      _
    // Predicated region
    $region38: #{tpu_custom_call.1} parent=1 // pred_check
      _
    $region39: #{tpu_custom_call.1} parent=1 // pred_check_branch
      %77 = sbr.rel (0) target = $region41
    $region40: #{tpu_custom_call.1} parent=1 // pred_region
      %78 = dma.done [#allocation7], 2048
    $region41: #{tpu_custom_call.1} parent=1 // pred_fallthru
      _
    // Predicated region
    $region42: #{tpu_custom_call.1} parent=1 // pred_check
      _
    $region43: #{tpu_custom_call.1} parent=1 // pred_check_branch
      %80 = sbr.rel (0) target = $region45
    $region44: #{tpu_custom_call.1} parent=1 // pred_region
      %81 = dma.done [#allocation10], 2048
    $region45: #{tpu_custom_call.1} parent=1 // pred_fallthru
      _
    %p82 = scmp.eq.s32.totalorder 0, 0
    // Predicated region
    $region46: #{tpu_custom_call.1} parent=1 // pred_check
      %p83 = pneg %p82
    $region47: #{tpu_custom_call.1} parent=1 // pred_check_branch
      %85 = sbr.rel (%p83) target = $region49
    $region48: #{tpu_custom_call.1} parent=1 // pred_region
      %v86 = vld [vmem:[%s6] sm:$0x1]
      %v88 = vlaneseq
      %v89 = vshrl.u32 %v88, 7
      %v90 = vsub.s32 0, %v89
      %v91 = vrot.slane %v86, %v90
      %v93 = vadd.f32 %v91, 0.0
      %94 = vst [vmem:[#allocation2] sm:$0xff] %v93
      %95 = vst [vmem:[#allocation2 + $0x8] sm:$0xff] %v93
    $region49: #{tpu_custom_call.1} parent=1 // pred_fallthru
      _
    %v96 = vld [vmem:[#allocation3] sm:$0xff]
    %v97 = vld [vmem:[#allocation3 + $0x8] sm:$0xff]
    %v98 = vld [vmem:[#allocation6] sm:$0xff]
    %v99 = vld [vmem:[#allocation6 + $0x8] sm:$0xff]
    %v100 = vld [vmem:[#allocation6 + $0x10] sm:$0xff]
    %v101 = vld [vmem:[#allocation6 + $0x18] sm:$0xff]
    %v102 = vld [vmem:[#allocation6 + $0x20] sm:$0xff]
    %v103 = vld [vmem:[#allocation6 + $0x28] sm:$0xff]
    %v104 = vld [vmem:[#allocation6 + $0x30] sm:$0xff]
    %v105 = vld [vmem:[#allocation6 + $0x38] sm:$0xff]
    %v106 = vld [vmem:[#allocation6 + $0x40] sm:$0xff]
    %v107 = vld [vmem:[#allocation6 + $0x48] sm:$0xff]
    %v108 = vld [vmem:[#allocation6 + $0x50] sm:$0xff]
    %v109 = vld [vmem:[#allocation6 + $0x58] sm:$0xff]
    %v110 = vld [vmem:[#allocation6 + $0x60] sm:$0xff]
    %v111 = vld [vmem:[#allocation6 + $0x68] sm:$0xff]
    %v112 = vld [vmem:[#allocation6 + $0x70] sm:$0xff]
    %v113 = vld [vmem:[#allocation6 + $0x78] sm:$0xff]
    %v114 = vld [vmem:[%s2] sm:$0x1]
    %v116 = vlaneseq
    %v117 = vshrl.u32 %v116, 7
    %v118 = vsub.s32 0, %v117
    %v119 = vrot.slane %v114, %v118
    %121 = vmatprep.subr.mxu0 0.0
    %122 = vmatpush1.msra.mxu0 %v98
    %123 = vmatprep.subr.mxu0 0.0
    %124 = vmatpush1.msra.mxu0 %v99
    %125 = vmatprep.subr.mxu0 0.0
    %126 = vmatpush1.msra.mxu0 %v100
    %127 = vmatprep.subr.mxu0 0.0
    %128 = vmatpush1.msra.mxu0 %v101
    %129 = vmatprep.subr.mxu0 0.0
    %130 = vmatpush1.msra.mxu0 %v102
    %131 = vmatprep.subr.mxu0 0.0
    %132 = vmatpush1.msra.mxu0 %v103
    %133 = vmatprep.subr.mxu0 0.0
    %134 = vmatpush1.msra.mxu0 %v104
    %135 = vmatprep.subr.mxu0 0.0
    %136 = vmatpush1.msra.mxu0 %v105
    %137 = vmatprep.subr.mxu0 0.0
    %138 = vmatpush1.msra.mxu0 %v106
    %139 = vmatprep.subr.mxu0 0.0
    %140 = vmatpush1.msra.mxu0 %v107
    %141 = vmatprep.subr.mxu0 0.0
    %142 = vmatpush1.msra.mxu0 %v108
    %143 = vmatprep.subr.mxu0 0.0
    %144 = vmatpush1.msra.mxu0 %v109
    %145 = vmatprep.subr.mxu0 0.0
    %146 = vmatpush1.msra.mxu0 %v110
    %147 = vmatprep.subr.mxu0 0.0
    %148 = vmatpush1.msra.mxu0 %v111
    %149 = vmatprep.subr.mxu0 0.0
    %150 = vmatpush1.msra.mxu0 %v112
    %151 = vmatprep.subr.mxu0 0.0
    %152 = vmatpush1.msra.mxu0 %v113
    %153 = vmatprep.subr.mxu0 0.0
    %154 = vmatpush1.msra.mxu0 0.0
    %155 = vmatprep.subr.mxu0 0.0
    %156 = vmatpush1.msra.mxu0 0.0
    %157 = vmatprep.subr.mxu0 0.0
    %158 = vmatpush1.msra.mxu0 0.0
    %159 = vmatprep.subr.mxu0 0.0
    %160 = vmatpush1.msra.mxu0 0.0
    %161 = vmatprep.subr.mxu0 0.0
    %162 = vmatpush1.msra.mxu0 0.0
    %163 = vmatprep.subr.mxu0 0.0
    %164 = vmatpush1.msra.mxu0 0.0
    %165 = vmatprep.subr.mxu0 0.0
    %166 = vmatpush1.msra.mxu0 0.0
    %167 = vmatprep.subr.mxu0 0.0
    %168 = vmatpush1.msra.mxu0 0.0
    %169 = vmatprep.subr.mxu0 0.0
    %170 = vmatpush1.msra.mxu0 0.0
    %171 = vmatprep.subr.mxu0 0.0
    %172 = vmatpush1.msra.mxu0 0.0
    %173 = vmatprep.subr.mxu0 0.0
    %174 = vmatpush1.msra.mxu0 0.0
    %175 = vmatprep.subr.mxu0 0.0
    %176 = vmatpush1.msra.mxu0 0.0
    %177 = vmatprep.subr.mxu0 0.0
    %178 = vmatpush1.msra.mxu0 0.0
    %179 = vmatprep.subr.mxu0 0.0
    %180 = vmatpush1.msra.mxu0 0.0
    %181 = vmatprep.subr.mxu0 0.0
    %182 = vmatpush1.msra.mxu0 0.0
    %183 = vmatprep.subr.mxu0 0.0
    %184 = vmatpush1.msra.mxu0 0.0
    %185 = vmatprep.mubr.f32.mxu0 0.0
    %186 = vmatmul.mubr.f32.gmra.mrb[0].mxu0 %v96
    %v187 = vpop.f32.mrb[0].mxu0
    %v188 = vadd.f32 %v119, %v187
    %v189 = vpop.f32.mrb[0].mxu0
    %190 = vmatprep.mubr.f32.mxu0 0.0
    %191 = vmatmul.mubr.f32.gmra.mrb[0].mxu0 %v97
    %v192 = vpop.f32.mrb[0].mxu0
    %v193 = vadd.f32 %v119, %v192
    %v194 = vpop.f32.mrb[0].mxu0
    %195 = vdwg.mxu0
    %v196 = vld [vmem:[#allocation8] sm:$0xff]
    %v197 = vld [vmem:[#allocation8 + $0x8] sm:$0xff]
    %v198 = vld [vmem:[#allocation8 + $0x10] sm:$0xff]
    %v199 = vld [vmem:[#allocation8 + $0x18] sm:$0xff]
    %v200 = vld [vmem:[#allocation8 + $0x20] sm:$0xff]
    %v201 = vld [vmem:[#allocation8 + $0x28] sm:$0xff]
    %v202 = vld [vmem:[#allocation8 + $0x30] sm:$0xff]
    %v203 = vld [vmem:[#allocation8 + $0x38] sm:$0xff]
    %v204 = vld [vmem:[#allocation8 + $0x40] sm:$0xff]
    %v205 = vld [vmem:[#allocation8 + $0x48] sm:$0xff]
    %v206 = vld [vmem:[#allocation8 + $0x50] sm:$0xff]
    %v207 = vld [vmem:[#allocation8 + $0x58] sm:$0xff]
    %v208 = vld [vmem:[#allocation8 + $0x60] sm:$0xff]
    %v209 = vld [vmem:[#allocation8 + $0x68] sm:$0xff]
    %v210 = vld [vmem:[#allocation8 + $0x70] sm:$0xff]
    %v211 = vld [vmem:[#allocation8 + $0x78] sm:$0xff]
    %v212 = vld [vmem:[%s4] sm:$0x1]
    %v214 = vlaneseq
    %v215 = vshrl.u32 %v214, 7
    %v216 = vsub.s32 0, %v215
    %v217 = vrot.slane %v212, %v216
    %219 = vmatprep.subr.mxu0 0.0
    %220 = vmatpush1.msra.mxu0 %v196
    %221 = vmatprep.subr.mxu0 0.0
    %222 = vmatpush1.msra.mxu0 %v197
    %223 = vmatprep.subr.mxu0 0.0
    %224 = vmatpush1.msra.mxu0 %v198
    %225 = vmatprep.subr.mxu0 0.0
    %226 = vmatpush1.msra.mxu0 %v199
    %227 = vmatprep.subr.mxu0 0.0
    %228 = vmatpush1.msra.mxu0 %v200
    %229 = vmatprep.subr.mxu0 0.0
    %230 = vmatpush1.msra.mxu0 %v201
    %231 = vmatprep.subr.mxu0 0.0
    %232 = vmatpush1.msra.mxu0 %v202
    %233 = vmatprep.subr.mxu0 0.0
    %234 = vmatpush1.msra.mxu0 %v203
    %235 = vmatprep.subr.mxu0 0.0
    %236 = vmatpush1.msra.mxu0 %v204
    %237 = vmatprep.subr.mxu0 0.0
    %238 = vmatpush1.msra.mxu0 %v205
    %239 = vmatprep.subr.mxu0 0.0
    %240 = vmatpush1.msra.mxu0 %v206
    %241 = vmatprep.subr.mxu0 0.0
    %242 = vmatpush1.msra.mxu0 %v207
    %243 = vmatprep.subr.mxu0 0.0
    %244 = vmatpush1.msra.mxu0 %v208
    %245 = vmatprep.subr.mxu0 0.0
    %246 = vmatpush1.msra.mxu0 %v209
    %247 = vmatprep.subr.mxu0 0.0
    %248 = vmatpush1.msra.mxu0 %v210
    %249 = vmatprep.subr.mxu0 0.0
    %250 = vmatpush1.msra.mxu0 %v211
    %251 = vmatprep.subr.mxu0 0.0
    %252 = vmatpush1.msra.mxu0 0.0
    %253 = vmatprep.subr.mxu0 0.0
    %254 = vmatpush1.msra.mxu0 0.0
    %255 = vmatprep.subr.mxu0 0.0
    %256 = vmatpush1.msra.mxu0 0.0
    %257 = vmatprep.subr.mxu0 0.0
    %258 = vmatpush1.msra.mxu0 0.0
    %259 = vmatprep.subr.mxu0 0.0
    %260 = vmatpush1.msra.mxu0 0.0
    %261 = vmatprep.subr.mxu0 0.0
    %262 = vmatpush1.msra.mxu0 0.0
    %263 = vmatprep.subr.mxu0 0.0
    %264 = vmatpush1.msra.mxu0 0.0
    %265 = vmatprep.subr.mxu0 0.0
    %266 = vmatpush1.msra.mxu0 0.0
    %267 = vmatprep.subr.mxu0 0.0
    %268 = vmatpush1.msra.mxu0 0.0
    %269 = vmatprep.subr.mxu0 0.0
    %270 = vmatpush1.msra.mxu0 0.0
    %271 = vmatprep.subr.mxu0 0.0
    %272 = vmatpush1.msra.mxu0 0.0
    %273 = vmatprep.subr.mxu0 0.0
    %274 = vmatpush1.msra.mxu0 0.0
    %275 = vmatprep.subr.mxu0 0.0
    %276 = vmatpush1.msra.mxu0 0.0
    %277 = vmatprep.subr.mxu0 0.0
    %278 = vmatpush1.msra.mxu0 0.0
    %279 = vmatprep.subr.mxu0 0.0
    %280 = vmatpush1.msra.mxu0 0.0
    %281 = vmatprep.subr.mxu0 0.0
    %282 = vmatpush1.msra.mxu0 0.0
    %283 = vmatprep.mubr.f32.mxu0 0.0
    %284 = vmatmul.mubr.f32.gmra.mrb[0].mxu0 %v96
    %v285 = vpop.f32.mrb[0].mxu0
    %v286 = vadd.f32 %v217, %v285
    %v287 = vpop.f32.mrb[0].mxu0
    %288 = vmatprep.mubr.f32.mxu0 0.0
    %289 = vmatmul.mubr.f32.gmra.mrb[0].mxu0 %v97
    %v290 = vpop.f32.mrb[0].mxu0
    %v291 = vadd.f32 %v217, %v290
    %v292 = vpop.f32.mrb[0].mxu0
    %293 = vdwg.mxu0
    %v294 = vxor.u32 %v188, 2147483648
    %v295 = vxor.u32 %v193, 2147483648
    %v296 = vmul.f32 %v294, 1.442695
    %v297 = vpow.pop %v296
    %v298 = vmul.f32 %v295, 1.442695
    %v299 = vpow.pop %v298
    %v300 = vadd.f32 %v297, 1.0
    %v301 = vadd.f32 %v299, 1.0
    %v302 = vrcp.pop %v300
    %v303 = vmul.f32 1.0, %v302
    %v304 = vrcp.pop %v301
    %v305 = vmul.f32 1.0, %v304
    %v306 = vmul.f32 %v188, %v303
    %v307 = vmul.f32 %v193, %v305
    %v308 = vmul.f32 %v306, %v286
    %v309 = vmul.f32 %v307, %v291
    %v310 = vld [vmem:[#allocation2] sm:$0xff]
    %v311 = vld [vmem:[#allocation2 + $0x8] sm:$0xff]
    %v312 = vld [vmem:[#allocation9] sm:$0xff]
    %v313 = vld [vmem:[#allocation9 + $0x8] sm:$0xff]
    %v314 = vld [vmem:[#allocation9 + $0x10] sm:$0xff]
    %v315 = vld [vmem:[#allocation9 + $0x18] sm:$0xff]
    %v316 = vld [vmem:[#allocation9 + $0x20] sm:$0xff]
    %v317 = vld [vmem:[#allocation9 + $0x28] sm:$0xff]
    %v318 = vld [vmem:[#allocation9 + $0x30] sm:$0xff]
    %v319 = vld [vmem:[#allocation9 + $0x38] sm:$0xff]
    %v320 = vld [vmem:[#allocation9 + $0x40] sm:$0xff]
    %v321 = vld [vmem:[#allocation9 + $0x48] sm:$0xff]
    %v322 = vld [vmem:[#allocation9 + $0x50] sm:$0xff]
    %v323 = vld [vmem:[#allocation9 + $0x58] sm:$0xff]
    %v324 = vld [vmem:[#allocation9 + $0x60] sm:$0xff]
    %v325 = vld [vmem:[#allocation9 + $0x68] sm:$0xff]
    %v326 = vld [vmem:[#allocation9 + $0x70] sm:$0xff]
    %v327 = vld [vmem:[#allocation9 + $0x78] sm:$0xff]
    %328 = vmatprep.subr.mxu0 0.0
    %329 = vmatpush1.msra.mxu0 %v312
    %330 = vmatprep.subr.mxu0 0.0
    %331 = vmatpush1.msra.mxu0 %v313
    %332 = vmatprep.subr.mxu0 0.0
    %333 = vmatpush1.msra.mxu0 %v314
    %334 = vmatprep.subr.mxu0 0.0
    %335 = vmatpush1.msra.mxu0 %v315
    %336 = vmatprep.subr.mxu0 0.0
    %337 = vmatpush1.msra.mxu0 %v316
    %338 = vmatprep.subr.mxu0 0.0
    %339 = vmatpush1.msra.mxu0 %v317
    %340 = vmatprep.subr.mxu0 0.0
    %341 = vmatpush1.msra.mxu0 %v318
    %342 = vmatprep.subr.mxu0 0.0
    %343 = vmatpush1.msra.mxu0 %v319
    %344 = vmatprep.subr.mxu0 0.0
    %345 = vmatpush1.msra.mxu0 %v320
    %346 = vmatprep.subr.mxu0 0.0
    %347 = vmatpush1.msra.mxu0 %v321
    %348 = vmatprep.subr.mxu0 0.0
    %349 = vmatpush1.msra.mxu0 %v322
    %350 = vmatprep.subr.mxu0 0.0
    %351 = vmatpush1.msra.mxu0 %v323
    %352 = vmatprep.subr.mxu0 0.0
    %353 = vmatpush1.msra.mxu0 %v324
    %354 = vmatprep.subr.mxu0 0.0
    %355 = vmatpush1.msra.mxu0 %v325
    %356 = vmatprep.subr.mxu0 0.0
    %357 = vmatpush1.msra.mxu0 %v326
    %358 = vmatprep.subr.mxu0 0.0
    %359 = vmatpush1.msra.mxu0 %v327
    %360 = vmatprep.subr.mxu0 0.0
    %361 = vmatpush1.msra.mxu0 0.0
    %362 = vmatprep.subr.mxu0 0.0
    %363 = vmatpush1.msra.mxu0 0.0
    %364 = vmatprep.subr.mxu0 0.0
    %365 = vmatpush1.msra.mxu0 0.0
    %366 = vmatprep.subr.mxu0 0.0
    %367 = vmatpush1.msra.mxu0 0.0
    %368 = vmatprep.subr.mxu0 0.0
    %369 = vmatpush1.msra.mxu0 0.0
    %370 = vmatprep.subr.mxu0 0.0
    %371 = vmatpush1.msra.mxu0 0.0
    %372 = vmatprep.subr.mxu0 0.0
    %373 = vmatpush1.msra.mxu0 0.0
    %374 = vmatprep.subr.mxu0 0.0
    %375 = vmatpush1.msra.mxu0 0.0
    %376 = vmatprep.subr.mxu0 0.0
    %377 = vmatpush1.msra.mxu0 0.0
    %378 = vmatprep.subr.mxu0 0.0
    %379 = vmatpush1.msra.mxu0 0.0
    %380 = vmatprep.subr.mxu0 0.0
    %381 = vmatpush1.msra.mxu0 0.0
    %382 = vmatprep.subr.mxu0 0.0
    %383 = vmatpush1.msra.mxu0 0.0
    %384 = vmatprep.subr.mxu0 0.0
    %385 = vmatpush1.msra.mxu0 0.0
    %386 = vmatprep.subr.mxu0 0.0
    %387 = vmatpush1.msra.mxu0 0.0
    %388 = vmatprep.subr.mxu0 0.0
    %389 = vmatpush1.msra.mxu0 0.0
    %390 = vmatprep.subr.mxu0 0.0
    %391 = vmatpush1.msra.mxu0 0.0
    %392 = vmatprep.mubr.f32.mxu0 0.0
    %393 = vmatmul.mubr.f32.gmra.mrb[0].mxu0 %v308
    %v394 = vpop.f32.mrb[0].mxu0
    %v395 = vadd.f32 0.0, %v394
    %v396 = vpop.f32.mrb[0].mxu0
    %397 = vmatprep.mubr.f32.mxu0 0.0
    %398 = vmatmul.mubr.f32.gmra.mrb[0].mxu0 %v309
    %v399 = vpop.f32.mrb[0].mxu0
    %v400 = vadd.f32 0.0, %v399
    %v401 = vpop.f32.mrb[0].mxu0
    %402 = vdwg.mxu0
    %v403 = vadd.f32 %v310, %v395
    %v404 = vadd.f32 %v311, %v400
    %405 = vst [vmem:[#allocation2] sm:$0xff] %v403
    %406 = vst [vmem:[#allocation2 + $0x8] sm:$0xff] %v404
    // Predicated region
    $region50: #{tpu_custom_call.1} parent=1 // pred_check
      %p407 = pneg %p82
    $region51: #{tpu_custom_call.1} parent=1 // pred_check_branch
      %409 = sbr.rel (%p407) target = $region53
    $region52: #{tpu_custom_call.1} parent=1 // pred_region
      %v410 = vld [vmem:[#allocation2] sm:$0xff]
      %v411 = vld [vmem:[#allocation2 + $0x8] sm:$0xff]
      %412 = vst [vmem:[#allocation11] sm:$0xff] %v410
      %413 = vst [vmem:[#allocation11 + $0x8] sm:$0xff] %v411
    $region53: #{tpu_custom_call.1} parent=1 // pred_fallthru
      _
    // Predicated region
    $region54: #{tpu_custom_call.1} parent=1 // pred_check
      _
    $region55: #{tpu_custom_call.1} parent=1 // pred_check_branch
      %415 = sbr.rel (0) target = $region57
    $region56: #{tpu_custom_call.1} parent=1 // pred_region
      %s417 = ssub.s32 256, 256
      %418 = vsyncadd [#allocation5], %s417
      %s419 = sshll.u32 [#allocation11], 4
      %s420 = int_to_ptr.vmem [resolvable:$true] %s419
      %425 = dma.vmem_to_hbm [thread:$0]  %s420, 256, %s7, [#allocation5], 128, 128, 8
    $region57: #{tpu_custom_call.1} parent=1 // pred_fallthru
      _
    // Predicated region
    $region58: #{tpu_custom_call.1} parent=1 // pred_check
      _
    $region59: #{tpu_custom_call.1} parent=1 // pred_check_branch
      %427 = sbr.rel (0) target = $region61
    $region60: #{tpu_custom_call.1} parent=1 // pred_region
      %428 = dma.done [#allocation5], 256
    $region61: #{tpu_custom_call.1} parent=1 // pred_fallthru
      _
    %429 = vsyncpa [#allocation4], 1
    %430 = vsyncpa [#allocation7], 1
    %431 = vsyncpa [#allocation10], 1
    %432 = vsyncpa [#allocation5], 1

</llo_original>
